<compile_context>
chip_gen: v5e
topology: v5e:2x2
jax: 0.10.0
libtpu: 0.0.40
codegen_flags: <defaults>
</compile_context>

<pallas_src>
import jax
import jax.numpy as jnp
from jax import lax
from jax.experimental import pallas as pl
from jax.experimental.pallas import tpu as pltpu


def _round_up(x, m):
    return ((x + m - 1) // m) * m


def _choose_tile(rows, lane_count, target_bytes, align, min_grid=4):
    """Rows per tile: ~target_bytes of f32 per buffer, but keep >= min_grid grid steps."""
    target = max(align, target_bytes // (lane_count * 4))
    cap = _round_up(pl.cdiv(rows, min_grid), align)
    tile = _round_up(min(target, cap), align)
    if tile >= rows:
        return rows  # single full block: no (8,128) divisibility constraint applies
    return tile


def _wide_packed_kernel(x_ref, w_ref, b_ref, o_ref):
    # x_ref: VMEM (TILE, pack*D) input dtype -- lane-packed batch tile (streamed)
    # w_ref: VMEM (pack*D, pack) f32         -- block-diagonal weight, resident
    # b_ref: SMEM (1, 1)         f32         -- scalar bias
    # o_ref: VMEM (TILE, pack)   f32
    x = x_ref[...].astype(jnp.float32)          # per-tile cast, hidden under DMA
    y = jnp.dot(x, w_ref[...], preferred_element_type=jnp.float32)
    o_ref[...] = y + b_ref[0, 0]


def _wide_rowmajor_kernel(x_ref, w_ref, b_ref, o_ref):
    # General fallback (D does not divide 128, or B not a multiple of the pack factor).
    # x_ref: VMEM (TILE_B, D); w_ref: VMEM (1, D) f32; o_ref: VMEM (1, TILE_B) f32
    x = x_ref[...].astype(jnp.float32)
    y = lax.dot_general(                         # contract D with D -> (1, TILE_B)
        w_ref[...], x,
        dimension_numbers=(((1,), (1,)), ((), ())),
        preferred_element_type=jnp.float32,
    )
    o_ref[...] = y + b_ref[0, 0]                 # lane-dense stores


def wide_layer(x, weight, bias, *, target_tile_bytes=4 * 1024 * 1024):
    """x: (B, D); weight: (1, D); bias: (1,) -> out (B, 1) float32."""
    B, D = x.shape
    weight = weight.astype(jnp.float32).reshape(1, D)
    bias2d = jnp.asarray(bias, jnp.float32).reshape(1, 1)

    compiler_params = pltpu.CompilerParams(
        dimension_semantics=("parallel",),       # shard batch tiles across TCs (v7x)
        vmem_limit_bytes=32 * 1024 * 1024,
    )

    pack = 128 // D if (0 < D <= 128 and 128 % D == 0) else 1
    if pack > 1 and B % pack == 0:
        # ---------- lane-packed path: (B, D) viewed row-major as (B/pack, 128) ----------
        rows = B // pack
        lanes = pack * D                          # == 128
        xp = x.reshape(rows, lanes)               # row-major view, no HBM copy
        # Block-diagonal weight: w_big[j*D + d, j] = w[d]
        w_big = (jnp.eye(pack, dtype=jnp.float32)[:, None, :]
                 * weight.reshape(D)[None, :, None]).reshape(lanes, pack)
        tile = _choose_tile(rows, lanes, target_tile_bytes, align=8)
        grid = pl.cdiv(rows, tile)
        out = pl.pallas_call(
            _wide_packed_kernel,
            out_shape=jax.ShapeDtypeStruct((grid * tile, pack), jnp.float32),
            grid=(grid,),
            in_specs=[
                pl.BlockSpec((tile, lanes), lambda i: (i, 0)),      # x tiles, streamed
                pl.BlockSpec((lanes, pack), lambda i: (0, 0)),      # weight, resident
                pl.BlockSpec(memory_space=pltpu.MemorySpace.SMEM),  # bias scalar
            ],
            out_specs=pl.BlockSpec((tile, pack), lambda i: (i, 0)),
            compiler_params=compiler_params,
        )(xp, w_big, bias2d)
        # (rows, pack) -> (B, 1); padded output rows >= rows are dropped.
        return out[:rows].reshape(B, 1)

    # ---------- general fallback path ----------
    lanes = _round_up(D, 128)                     # VMEM lane-padding estimate for sizing
    tile = _choose_tile(B, lanes, target_tile_bytes, align=128)
    grid = pl.cdiv(B, tile)
    out = pl.pallas_call(
        _wide_rowmajor_kernel,
        out_shape=jax.ShapeDtypeStruct((1, grid * tile), jnp.float32),
        grid=(grid,),
        in_specs=[
            pl.BlockSpec((tile, D), lambda i: (i, 0)),          # x tiles, streamed
            pl.BlockSpec((1, D), lambda i: (0, 0)),             # weight, resident
            pl.BlockSpec(memory_space=pltpu.MemorySpace.SMEM),  # bias scalar
        ],
        out_specs=pl.BlockSpec((1, tile), lambda i: (0, i)),    # lane-dense output
        compiler_params=compiler_params,
    )(x, weight, bias2d)
    return out[0, :B].reshape(B, 1)


if __name__ == "__main__":
    key = jax.random.PRNGKey(0)
    k_w, k_x, k_x2, k_x3 = jax.random.split(key, 4)

    dense_size = 32  # number of dense features
    # WideLayer._init_weight: weight ~ Normal(0, 0.01), bias = 0
    weight = (0.01 * jax.random.normal(k_w, (1, dense_size))).astype(jnp.float32)
    bias = jnp.zeros((1,), dtype=jnp.float32)

    # 1) Small batch, lane-packed path, single tile.
    batch = 8
    x = jax.random.normal(k_x, (batch, dense_size), dtype=jnp.float32)
    out = jax.block_until_ready(wide_layer(x, weight, bias))
    ref = x @ weight.T + bias
    assert out.shape == (batch, 1)
    assert jnp.allclose(out, ref, atol=1e-5, rtol=1e-4)

    # 2) Larger batch, lane-packed path, multi-tile grid with a partial last block
    #    (no jnp.pad of x -- padding exists only in the tiny output array).
    batch2 = 300
    x2 = jax.random.normal(k_x2, (batch2, dense_size), dtype=jnp.float32)
    out2 = jax.block_until_ready(wide_layer(x2, weight, bias))
    ref2 = x2 @ weight.T + bias
    assert out2.shape == (batch2, 1)
    assert jnp.allclose(out2, ref2, atol=1e-5, rtol=1e-4)

    # 3) bf16 input stays bf16 in HBM; the f32 cast happens per-tile inside the kernel.
    x2_bf = x2.astype(jnp.bfloat16)
    out_bf = jax.block_until_ready(wide_layer(x2_bf, weight, bias))
    ref_bf = x2_bf.astype(jnp.float32) @ weight.T + bias
    assert out_bf.shape == (batch2, 1)
    assert jnp.allclose(out_bf, ref_bf, atol=1e-4, rtol=1e-3)

    # 4) Batch not a multiple of the pack factor -> general fallback path.
    batch3 = 7
    x3 = jax.random.normal(k_x3, (batch3, dense_size), dtype=jnp.float32)
    out3 = jax.block_until_ready(wide_layer(x3, weight, bias))
    ref3 = x3 @ weight.T + bias
    assert out3.shape == (batch3, 1)
    assert jnp.allclose(out3, ref3, atol=1e-5, rtol=1e-4)

    print("KERNEL_OK")
</pallas_src>

<mosaic_0001>
module attributes {stable_mosaic.version = 11 : i64} {
  func.func @_wide_packed_kernel(%arg0: i32, %arg1: memref<2x128xf32, #tpu.memory_space<vmem>>, %arg2: memref<128x4xf32, #tpu.memory_space<vmem>>, %arg3: memref<1x1xf32, #tpu.memory_space<smem>>, %arg4: memref<2x4xf32, #tpu.memory_space<vmem>>) attributes {dimension_semantics = [#tpu.dimension_semantics<parallel>], iteration_bounds = array<i64: 1>, scalar_prefetch = 0 : i64, scratch_operands = 0 : i64, tpu.core_type = #tpu.core_type<tc>, window_params = [{transform_indices = @transform_0, window_bounds = array<i64: 2, 128>}, {pipeline_mode = #tpu.pipeline_mode<synchronous>, transform_indices = @transform_1, window_bounds = array<i64: 128, 4>}, {transform_indices = @transform_2, window_bounds = array<i64: 1, 1>}, {transform_indices = @transform_3, window_bounds = array<i64: 2, 4>}]} {
    %c0 = arith.constant 0 : index
    %c0_0 = arith.constant 0 : index
    %0 = vector.load %arg1[%c0, %c0_0] : memref<2x128xf32, #tpu.memory_space<vmem>>, vector<2x128xf32>
    %c0_1 = arith.constant 0 : index
    %c0_2 = arith.constant 0 : index
    %1 = vector.load %arg2[%c0_1, %c0_2] : memref<128x4xf32, #tpu.memory_space<vmem>>, vector<128x4xf32>
    %cst = arith.constant dense<0.000000e+00> : vector<2x4xf32>
    %2 = tpu.matmul %0, %1, %cst {dimension_numbers = #tpu.dot_dimension_numbers<[1], [0], [0], [1], [0, 0, 1, 1], [], []>} : vector<2x128xf32>, vector<128x4xf32>, vector<2x4xf32> -> vector<2x4xf32>
    %c0_3 = arith.constant 0 : index
    %c0_4 = arith.constant 0 : index
    %3 = memref.load %arg3[%c0_3, %c0_4] : memref<1x1xf32, #tpu.memory_space<smem>>
    %4 = vector.broadcast %3 : f32 to vector<2x4xf32>
    %5 = arith.addf %2, %4 : vector<2x4xf32>
    %c0_5 = arith.constant 0 : index
    %c0_6 = arith.constant 0 : index
    %6 = vector.load %arg4[%c0_5, %c0_6] : memref<2x4xf32, #tpu.memory_space<vmem>>, vector<2x4xf32>
    tpu.vector_store %arg4[%c0_5, %c0_6], %5 {strides = array<i32>} : memref<2x4xf32, #tpu.memory_space<vmem>>, vector<2x4xf32>,
    return
  }
  func.func @transform_0(%arg0: i32) -> (i32, i32) {
    %c0_i32 = arith.constant 0 : i32
    %c0_i32_0 = arith.constant 0 : i32
    return %arg0, %c0_i32 : i32, i32
  }
  func.func @transform_1(%arg0: i32) -> (i32, i32) {
    %c0_i32 = arith.constant 0 : i32
    %c0_i32_0 = arith.constant 0 : i32
    %c0_i32_1 = arith.constant 0 : i32
    return %c0_i32, %c0_i32_0 : i32, i32
  }
  func.func @transform_2(%arg0: i32) -> (i32, i32) {
    %c0_i32 = arith.constant 0 : i32
    %c0_i32_0 = arith.constant 0 : i32
    %c0_i32_1 = arith.constant 0 : i32
    return %c0_i32, %c0_i32_0 : i32, i32
  }
  func.func @transform_3(%arg0: i32) -> (i32, i32) {
    %c0_i32 = arith.constant 0 : i32
    %c0_i32_0 = arith.constant 0 : i32
    return %arg0, %c0_i32 : i32, i32
  }
}

</mosaic_0001>

<llo_original>
// kernel: tpu_custom_call.1
$region0: #{tpu_custom_call.1}
  #allocation0 [shape = 'u32[]', space=smem, size = 0x4, offset = 0x4, fixed_abs, tag = 'smem constant byte address 0x4 - core index']
  #allocation1 [shape = 'u32[72,128]{1,0:T(1,128)}', space=vmem, size = 0x9000, scoped, tag = 'internal scratch']
  #allocation2 [shape = 'f32[1,1]{1,0:T(1,128)S(6)}', space=smem, size = 0x200, scoped, tag = 'scoped memory for tpu_custom_call.1']
  %s0 = inlined_call_operand.vmem [shape: f32[2,128], index: 0, kind: input, shape index: {}]
  %s1 = inlined_call_operand.vmem [shape: f32[128,4], index: 1, kind: input, shape index: {}]
  %s2 = inlined_call_operand.<no memory space> [shape: f32[1,1], index: 2, kind: input, shape index: {}]
  %s3 = inlined_call_operand.hbm [shape: f32[2,4], index: 3, kind: output, shape index: {}]
  %s4 = sld [smem:[#allocation0]]
  $region22: #{tpu_custom_call.1} parent=0
    _
  %s6 = ssub.s32 1, %s4
  %s7 = scalar_select 0, %s6, %s4
  %8 = sst [smem:[#allocation2]] %s2
  $region1: #{tpu_custom_call.1} parent=0
    #allocation3 [shape = 'u8[1024]{0}', space=vmem, size = 0x400, scoped, tag = 'output window, operand 0, single buffered']
    #allocation4 [shape = 's32[1]{0}', space=sflag, size = 0x4, scoped, tag = 'scoped memory for tpu_custom_call.1']
    %9 = vsyncpa [#allocation4], 0
    // Predicated region
    $region2: #{tpu_custom_call.1} parent=1 // pred_check
      _
    $region3: #{tpu_custom_call.1} parent=1 // pred_check_branch
      %11 = sbr.rel (0) target = $region5
    $region4: #{tpu_custom_call.1} parent=1 // pred_region
      _
    $region5: #{tpu_custom_call.1} parent=1 // pred_fallthru
      _
    // Predicated region
    $region6: #{tpu_custom_call.1} parent=1 // pred_check
      _
    $region7: #{tpu_custom_call.1} parent=1 // pred_check_branch
      %13 = sbr.rel (0) target = $region9
    $region8: #{tpu_custom_call.1} parent=1 // pred_region
      _
    $region9: #{tpu_custom_call.1} parent=1 // pred_fallthru
      _
    // Predicated region
    $region10: #{tpu_custom_call.1} parent=1 // pred_check
      _
    $region11: #{tpu_custom_call.1} parent=1 // pred_check_branch
      %15 = sbr.rel (0) target = $region13
    $region12: #{tpu_custom_call.1} parent=1 // pred_region
      _
    $region13: #{tpu_custom_call.1} parent=1 // pred_fallthru
      _
    %v16 = vld [vmem:[%s0] sm:$0x3]
    %v17 = vld [vmem:[%s1] sm:$0xff]
    %v18 = vld [vmem:[%s1 + $0x8] sm:$0xff]
    %v19 = vld [vmem:[%s1 + $0x10] sm:$0xff]
    %v20 = vld [vmem:[%s1 + $0x18] sm:$0xff]
    %v21 = vld [vmem:[%s1 + $0x20] sm:$0xff]
    %v22 = vld [vmem:[%s1 + $0x28] sm:$0xff]
    %v23 = vld [vmem:[%s1 + $0x30] sm:$0xff]
    %v24 = vld [vmem:[%s1 + $0x38] sm:$0xff]
    %v25 = vld [vmem:[%s1 + $0x40] sm:$0xff]
    %v26 = vld [vmem:[%s1 + $0x48] sm:$0xff]
    %v27 = vld [vmem:[%s1 + $0x50] sm:$0xff]
    %v28 = vld [vmem:[%s1 + $0x58] sm:$0xff]
    %v29 = vld [vmem:[%s1 + $0x60] sm:$0xff]
    %v30 = vld [vmem:[%s1 + $0x68] sm:$0xff]
    %v31 = vld [vmem:[%s1 + $0x70] sm:$0xff]
    %v32 = vld [vmem:[%s1 + $0x78] sm:$0xff]
    %s33 = sld [smem:[#allocation2]]
    %v34 = vstv %s33
    %35 = vmatpush.msra.mxu0 %v32
    %36 = vmatpush.msra.mxu0 %v31
    %37 = vmatpush.msra.mxu0 %v30
    %38 = vmatpush.msra.mxu0 %v29
    %39 = vmatpush.msra.mxu0 %v28
    %40 = vmatpush.msra.mxu0 %v27
    %41 = vmatpush.msra.mxu0 %v26
    %42 = vmatpush.msra.mxu0 %v25
    %43 = vmatpush.msra.mxu0 %v24
    %44 = vmatpush.msra.mxu0 %v23
    %45 = vmatpush.msra.mxu0 %v22
    %46 = vmatpush.msra.mxu0 %v21
    %47 = vmatpush.msra.mxu0 %v20
    %48 = vmatpush.msra.mxu0 %v19
    %49 = vmatpush.msra.mxu0 %v18
    %50 = vmatpush.msra.mxu0 %v17
    %51 = vmatmul.f32.gmra.mxu0 %v16
    %v52 = vpop.f32.mrf.mxu0
    %v53 = vadd.f32 %v34, %v52
    %54 = vdwg.mxu0
    %vm55 = vcmask 25600
    %56 = vst.msk [vmem:[#allocation3] sm:$0x3] %vm55, %v53
    // Predicated region
    $region14: #{tpu_custom_call.1} parent=1 // pred_check
      _
    $region15: #{tpu_custom_call.1} parent=1 // pred_check_branch
      %58 = sbr.rel (0) target = $region17
    $region16: #{tpu_custom_call.1} parent=1 // pred_region
      %60 = vsyncadd [#allocation4], 0
      %s62 = sshll.u32 [#allocation3], 4
      %s63 = int_to_ptr.vmem [resolvable:$true] %s62
      %s64 = sshll.u32 %s3, 4
      %s65 = int_to_ptr.hbm [resolvable:$true] %s64
      %67 = dma.vmem_to_hbm [thread:$0]  %s63, 32, %s65, [#allocation4]
    $region17: #{tpu_custom_call.1} parent=1 // pred_fallthru
      _
    // Predicated region
    $region18: #{tpu_custom_call.1} parent=1 // pred_check
      _
    $region19: #{tpu_custom_call.1} parent=1 // pred_check_branch
      %69 = sbr.rel (0) target = $region21
    $region20: #{tpu_custom_call.1} parent=1 // pred_region
      %71 = dma.done [#allocation4], 32
    $region21: #{tpu_custom_call.1} parent=1 // pred_fallthru
      _
    %72 = vsyncpa [#allocation4], 1

</llo_original>
